<compile_context>
chip_gen: v7x
topology: tpu7x:2x2x1
jax: 0.10.0
libtpu: 0.0.40
codegen_flags: <defaults>
</compile_context>

<pallas_src>
import jax
import jax.numpy as jnp
from jax.experimental import pallas as pl
from jax.experimental.pallas import tpu as pltpu

HIDDEN1 = 128
HIDDEN2 = 128


def _round_up(x, m):
    return ((x + m - 1) // m) * m


def _actor_critic_kernel(x_ref, w1_ref, b1_ref, w2_ref, b2_ref, wh_ref, bh_ref,
                         logits_ref, value_ref):
    # fc1 + ReLU  (bf16 MXU matmul, f32 accumulate, f32 bias/ReLU on the VPU)
    x = x_ref[...].astype(jnp.bfloat16)
    h1 = jnp.dot(x, w1_ref[...], preferred_element_type=jnp.float32) + b1_ref[...]
    h1 = jnp.maximum(h1, 0.0).astype(jnp.bfloat16)
    # fc2 + ReLU
    h2 = jnp.dot(h1, w2_ref[...], preferred_element_type=jnp.float32) + b2_ref[...]
    h2 = jnp.maximum(h2, 0.0).astype(jnp.bfloat16)
    # fused actor+critic head: lanes [:n_actions] = logits, lane n_actions = value.
    head = (jnp.dot(h2, wh_ref[...], preferred_element_type=jnp.float32)
            + bh_ref[...])
    n_act = logits_ref.shape[-1]                      # static
    logits_ref[...] = head[:, :n_act].astype(logits_ref.dtype)
    value_ref[...] = head[:, n_act:n_act + 1].astype(value_ref.dtype)


def init_params(key, obs_dim, n_actions):
    """Deterministic init mimicking nn.Linear's U(-1/sqrt(fan_in), 1/sqrt(fan_in)).
    Weights stored as [in, out] (transposed vs torch) so the kernel does x @ W."""
    def linear(key, fan_in, fan_out):
        kw, kb = jax.random.split(key)
        bound = 1.0 / jnp.sqrt(jnp.float32(fan_in))
        w = jax.random.uniform(kw, (fan_in, fan_out), jnp.float32, -bound, bound)
        b = jax.random.uniform(kb, (fan_out,), jnp.float32, -bound, bound)
        return w, b

    k1, k2, k3, k4 = jax.random.split(key, 4)
    w1, b1 = linear(k1, obs_dim, HIDDEN1)
    w2, b2 = linear(k2, HIDDEN1, HIDDEN2)
    wa, ba = linear(k3, HIDDEN2, n_actions)
    wc, bc = linear(k4, HIDDEN2, 1)
    return (w1, b1, w2, b2, wa, ba, wc, bc)


def prepare_params(params, n_actions):
    """One-time weight prep (hoisted off the hot path): fuse actor+critic head,
    pad head lanes to a multiple of 128, cast matmul operands to bf16."""
    w1, b1, w2, b2, wa, ba, wc, bc = params
    head_pad = pl.cdiv(n_actions + 1, 128) * 128      # actor lanes + 1 critic lane
    wh = jnp.zeros((HIDDEN2, head_pad), jnp.float32)
    wh = wh.at[:, :n_actions].set(wa)
    wh = wh.at[:, n_actions:n_actions + 1].set(wc)
    bh = jnp.zeros((1, head_pad), jnp.float32)
    bh = bh.at[:, :n_actions].set(ba[None, :])
    bh = bh.at[:, n_actions:n_actions + 1].set(bc[None, :])
    return dict(
        w1=w1.astype(jnp.bfloat16), b1=b1[None, :].astype(jnp.float32),
        w2=w2.astype(jnp.bfloat16), b2=b2[None, :].astype(jnp.float32),
        wh=wh.astype(jnp.bfloat16), bh=bh,
        n_actions=n_actions, head_pad=head_pad)


def _xla_forward(x, prep):
    """Tiny-batch fallback: same math (bf16 operands, f32 accumulate), no custom call."""
    bf = jnp.bfloat16
    n = prep["n_actions"]
    h1 = jnp.maximum(jnp.dot(x.astype(bf), prep["w1"],
                             preferred_element_type=jnp.float32) + prep["b1"], 0.0)
    h2 = jnp.maximum(jnp.dot(h1.astype(bf), prep["w2"],
                             preferred_element_type=jnp.float32) + prep["b2"], 0.0)
    head = jnp.dot(h2.astype(bf), prep["wh"],
                   preferred_element_type=jnp.float32) + prep["bh"]
    return head[:, :n], head[:, n:n + 1]


def actor_critic_forward(x, prep, *, tile_b=2048, min_pallas_batch=64):
    """x: [B, obs_dim]. Returns (action_logits [B, n_actions], state_value [B, 1]).
    Note: 'action_probabilities' in the torch module are raw logits (no softmax)."""
    B, obs_dim = x.shape
    n_actions, head_pad = prep["n_actions"], prep["head_pad"]
    w1, b1, w2, b2, wh, bh = (prep[k] for k in ("w1", "b1", "w2", "b2", "wh", "bh"))
    x = x.astype(jnp.float32)

    # Tiny batches: custom-call overhead dwarfs the work; let XLA fuse it.
    if B <= min_pallas_batch:
        return _xla_forward(x, prep)

    # Batch tile: as large as tile_b, but never so large the grid drops below
    # 2 steps (so v7x's two TensorCores both get work via the "parallel" axis).
    blk_b = min(tile_b, max(8, _round_up(pl.cdiv(B, 2), 8)))
    if blk_b >= B:
        blk_b = B          # single full-array block (waives the (8,128) rule)
    grid = (pl.cdiv(B, blk_b),)

    cost = pl.CostEstimate(
        flops=2 * B * (obs_dim * HIDDEN1 + HIDDEN1 * HIDDEN2 + HIDDEN2 * head_pad),
        transcendentals=0,
        bytes_accessed=(x.size * 4
                        + B * (n_actions + 1) * 4
                        + (w1.size + w2.size + wh.size) * 2
                        + (b1.size + b2.size + bh.size) * 4))

    logits, value = pl.pallas_call(
        _actor_critic_kernel,
        out_shape=(jax.ShapeDtypeStruct((B, n_actions), jnp.float32),
                   jax.ShapeDtypeStruct((B, 1), jnp.float32)),
        grid_spec=pltpu.PrefetchScalarGridSpec(
            num_scalar_prefetch=0,
            grid=grid,
            in_specs=[
                pl.BlockSpec((blk_b, obs_dim), lambda i: (i, 0)),   # activations tile
                pl.BlockSpec(w1.shape, lambda i: (0, 0)),           # weights resident
                pl.BlockSpec(b1.shape, lambda i: (0, 0)),
                pl.BlockSpec(w2.shape, lambda i: (0, 0)),
                pl.BlockSpec(b2.shape, lambda i: (0, 0)),
                pl.BlockSpec(wh.shape, lambda i: (0, 0)),
                pl.BlockSpec(bh.shape, lambda i: (0, 0)),
            ],
            out_specs=[
                pl.BlockSpec((blk_b, n_actions), lambda i: (i, 0)),  # logits
                pl.BlockSpec((blk_b, 1), lambda i: (i, 0)),          # state value
            ],
        ),
        compiler_params=pltpu.CompilerParams(dimension_semantics=("parallel",)),
        cost_estimate=cost,
    )(x, w1, b1, w2, b2, wh, bh)

    return logits, value


def reference_forward_f32(x, params):
    w1, b1, w2, b2, wa, ba, wc, bc = params
    h1 = jnp.maximum(x @ w1 + b1, 0.0)
    h2 = jnp.maximum(h1 @ w2 + b2, 0.0)
    return h2 @ wa + ba, h2 @ wc + bc


def reference_forward_bf16(x, params):
    """Same arithmetic as the kernel: bf16 operands, f32 accumulation."""
    w1, b1, w2, b2, wa, ba, wc, bc = params
    bf = jnp.bfloat16
    dot = lambda a, b: jnp.dot(a.astype(bf), b.astype(bf),
                               preferred_element_type=jnp.float32)
    h1 = jnp.maximum(dot(x, w1) + b1, 0.0)
    h2 = jnp.maximum(dot(h1, w2) + b2, 0.0)
    return dot(h2, wa) + ba, dot(h2, wc) + bc


if __name__ == "__main__":
    key = jax.random.PRNGKey(0)
    k_params, k_x, k_xl = jax.random.split(key, 3)

    obs_dim = 8       # state_dims[0]
    n_actions = 4
    batch = 2

    params = init_params(k_params, obs_dim, n_actions)
    prep = prepare_params(params, n_actions)       # one-time; off the hot path

    # --- tiny-batch path (B=2): XLA fallback, no custom-call overhead ---
    x = jax.random.normal(k_x, (batch, obs_dim), jnp.float32)
    logits, value = actor_critic_forward(x, prep)
    logits = jax.block_until_ready(logits)
    value = jax.block_until_ready(value)
    assert logits.shape == (batch, n_actions)
    assert value.shape == (batch, 1)
    ref_l_bf, ref_v_bf = reference_forward_bf16(x, params)
    ref_l_32, ref_v_32 = reference_forward_f32(x, params)
    assert jnp.allclose(logits, ref_l_bf, atol=5e-3, rtol=5e-3)
    assert jnp.allclose(value, ref_v_bf, atol=5e-3, rtol=5e-3)
    assert jnp.allclose(logits, ref_l_32, atol=3e-2, rtol=3e-2)
    assert jnp.allclose(value, ref_v_32, atol=3e-2, rtol=3e-2)

    # --- Pallas kernel, small shape (forced): single full-array block ---
    logits_k, value_k = actor_critic_forward(x, prep, min_pallas_batch=0)
    logits_k = jax.block_until_ready(logits_k)
    value_k = jax.block_until_ready(value_k)
    assert logits_k.shape == (batch, n_actions)
    assert value_k.shape == (batch, 1)
    assert jnp.allclose(logits_k, ref_l_bf, atol=5e-3, rtol=5e-3)
    assert jnp.allclose(value_k, ref_v_bf, atol=5e-3, rtol=5e-3)

    # --- Pallas kernel, large batch: 2-step "parallel" grid (megacore-shardable) ---
    Bl = 4096
    xl = jax.random.normal(k_xl, (Bl, obs_dim), jnp.float32)
    logits_l, value_l = actor_critic_forward(xl, prep, tile_b=2048)
    logits_l = jax.block_until_ready(logits_l)
    value_l = jax.block_until_ready(value_l)
    ref_ll, ref_vl = reference_forward_f32(xl, params)
    assert logits_l.shape == (Bl, n_actions)
    assert value_l.shape == (Bl, 1)
    assert jnp.allclose(logits_l, ref_ll, atol=3e-2, rtol=3e-2)
    assert jnp.allclose(value_l, ref_vl, atol=3e-2, rtol=3e-2)

    print("KERNEL_OK")
</pallas_src>

<mosaic_0001>
module attributes {stable_mosaic.version = 11 : i64} {
  func.func @_actor_critic_kernel(%arg0: i32, %arg1: memref<2x8xf32, #tpu.memory_space<vmem>>, %arg2: memref<8x128xbf16, #tpu.memory_space<vmem>>, %arg3: memref<1x128xf32, #tpu.memory_space<vmem>>, %arg4: memref<128x128xbf16, #tpu.memory_space<vmem>>, %arg5: memref<1x128xf32, #tpu.memory_space<vmem>>, %arg6: memref<128x128xbf16, #tpu.memory_space<vmem>>, %arg7: memref<1x128xf32, #tpu.memory_space<vmem>>, %arg8: memref<2x4xf32, #tpu.memory_space<vmem>>, %arg9: memref<2x1xf32, #tpu.memory_space<vmem>>) attributes {dimension_semantics = [#tpu.dimension_semantics<parallel>], iteration_bounds = array<i64: 1>, scalar_prefetch = 0 : i64, scratch_operands = 0 : i64, tpu.core_type = #tpu.core_type<tc>, window_params = [{transform_indices = @transform_0, window_bounds = array<i64: 2, 8>}, {pipeline_mode = #tpu.pipeline_mode<synchronous>, transform_indices = @transform_1, window_bounds = array<i64: 8, 128>}, {pipeline_mode = #tpu.pipeline_mode<synchronous>, transform_indices = @transform_2, window_bounds = array<i64: 1, 128>}, {pipeline_mode = #tpu.pipeline_mode<synchronous>, transform_indices = @transform_3, window_bounds = array<i64: 128, 128>}, {pipeline_mode = #tpu.pipeline_mode<synchronous>, transform_indices = @transform_4, window_bounds = array<i64: 1, 128>}, {pipeline_mode = #tpu.pipeline_mode<synchronous>, transform_indices = @transform_5, window_bounds = array<i64: 128, 128>}, {pipeline_mode = #tpu.pipeline_mode<synchronous>, transform_indices = @transform_6, window_bounds = array<i64: 1, 128>}, {transform_indices = @transform_7, window_bounds = array<i64: 2, 4>}, {transform_indices = @transform_8, window_bounds = array<i64: 2, 1>}]} {
    %c0 = arith.constant 0 : index
    %c0_0 = arith.constant 0 : index
    %0 = vector.load %arg1[%c0, %c0_0] : memref<2x8xf32, #tpu.memory_space<vmem>>, vector<2x8xf32>
    %1 = arith.truncf %0 : vector<2x8xf32> to vector<2x8xbf16>
    %c0_1 = arith.constant 0 : index
    %c0_2 = arith.constant 0 : index
    %2 = vector.load %arg2[%c0_1, %c0_2] : memref<8x128xbf16, #tpu.memory_space<vmem>>, vector<8x128xbf16>
    %cst = arith.constant dense<0.000000e+00> : vector<2x128xf32>
    %3 = tpu.matmul %1, %2, %cst {dimension_numbers = #tpu.dot_dimension_numbers<[1], [0], [0], [1], [0, 0, 1, 1], [], []>} : vector<2x8xbf16>, vector<8x128xbf16>, vector<2x128xf32> -> vector<2x128xf32>
    %c0_3 = arith.constant 0 : index
    %c0_4 = arith.constant 0 : index
    %4 = vector.load %arg3[%c0_3, %c0_4] : memref<1x128xf32, #tpu.memory_space<vmem>>, vector<1x128xf32>
    %5 = vector.broadcast %4 : vector<1x128xf32> to vector<2x128xf32>
    %6 = arith.addf %3, %5 : vector<2x128xf32>
    %cst_5 = arith.constant 0.000000e+00 : f32
    %7 = vector.broadcast %cst_5 : f32 to vector<2x128xf32>
    %8 = arith.maximumf %6, %7 : vector<2x128xf32>
    %9 = arith.truncf %8 : vector<2x128xf32> to vector<2x128xbf16>
    %c0_6 = arith.constant 0 : index
    %c0_7 = arith.constant 0 : index
    %10 = vector.load %arg4[%c0_6, %c0_7] : memref<128x128xbf16, #tpu.memory_space<vmem>>, vector<128x128xbf16>
    %cst_8 = arith.constant dense<0.000000e+00> : vector<2x128xf32>
    %11 = tpu.matmul %9, %10, %cst_8 {dimension_numbers = #tpu.dot_dimension_numbers<[1], [0], [0], [1], [0, 0, 1, 1], [], []>} : vector<2x128xbf16>, vector<128x128xbf16>, vector<2x128xf32> -> vector<2x128xf32>
    %c0_9 = arith.constant 0 : index
    %c0_10 = arith.constant 0 : index
    %12 = vector.load %arg5[%c0_9, %c0_10] : memref<1x128xf32, #tpu.memory_space<vmem>>, vector<1x128xf32>
    %13 = vector.broadcast %12 : vector<1x128xf32> to vector<2x128xf32>
    %14 = arith.addf %11, %13 : vector<2x128xf32>
    %cst_11 = arith.constant 0.000000e+00 : f32
    %15 = vector.broadcast %cst_11 : f32 to vector<2x128xf32>
    %16 = arith.maximumf %14, %15 : vector<2x128xf32>
    %17 = arith.truncf %16 : vector<2x128xf32> to vector<2x128xbf16>
    %c0_12 = arith.constant 0 : index
    %c0_13 = arith.constant 0 : index
    %18 = vector.load %arg6[%c0_12, %c0_13] : memref<128x128xbf16, #tpu.memory_space<vmem>>, vector<128x128xbf16>
    %cst_14 = arith.constant dense<0.000000e+00> : vector<2x128xf32>
    %19 = tpu.matmul %17, %18, %cst_14 {dimension_numbers = #tpu.dot_dimension_numbers<[1], [0], [0], [1], [0, 0, 1, 1], [], []>} : vector<2x128xbf16>, vector<128x128xbf16>, vector<2x128xf32> -> vector<2x128xf32>
    %c0_15 = arith.constant 0 : index
    %c0_16 = arith.constant 0 : index
    %20 = vector.load %arg7[%c0_15, %c0_16] : memref<1x128xf32, #tpu.memory_space<vmem>>, vector<1x128xf32>
    %21 = vector.broadcast %20 : vector<1x128xf32> to vector<2x128xf32>
    %22 = arith.addf %19, %21 : vector<2x128xf32>
    %23 = vector.extract_strided_slice %22 {offsets = [0, 0], sizes = [2, 4], strides = [1, 1]} : vector<2x128xf32> to vector<2x4xf32>
    %c0_17 = arith.constant 0 : index
    %c0_18 = arith.constant 0 : index
    %24 = vector.load %arg8[%c0_17, %c0_18] : memref<2x4xf32, #tpu.memory_space<vmem>>, vector<2x4xf32>
    tpu.vector_store %arg8[%c0_17, %c0_18], %23 {strides = array<i32>} : memref<2x4xf32, #tpu.memory_space<vmem>>, vector<2x4xf32>,
    %25 = vector.extract_strided_slice %22 {offsets = [0, 4], sizes = [2, 1], strides = [1, 1]} : vector<2x128xf32> to vector<2x1xf32>
    %c0_19 = arith.constant 0 : index
    %c0_20 = arith.constant 0 : index
    %26 = vector.load %arg9[%c0_19, %c0_20] : memref<2x1xf32, #tpu.memory_space<vmem>>, vector<2x1xf32>
    tpu.vector_store %arg9[%c0_19, %c0_20], %25 {strides = array<i32>} : memref<2x1xf32, #tpu.memory_space<vmem>>, vector<2x1xf32>,
    return
  }
  func.func @transform_0(%arg0: i32) -> (i32, i32) {
    %c0_i32 = arith.constant 0 : i32
    %c0_i32_0 = arith.constant 0 : i32
    return %arg0, %c0_i32 : i32, i32
  }
  func.func @transform_1(%arg0: i32) -> (i32, i32) {
    %c0_i32 = arith.constant 0 : i32
    %c0_i32_0 = arith.constant 0 : i32
    %c0_i32_1 = arith.constant 0 : i32
    return %c0_i32, %c0_i32_0 : i32, i32
  }
  func.func @transform_2(%arg0: i32) -> (i32, i32) {
    %c0_i32 = arith.constant 0 : i32
    %c0_i32_0 = arith.constant 0 : i32
    %c0_i32_1 = arith.constant 0 : i32
    return %c0_i32, %c0_i32_0 : i32, i32
  }
  func.func @transform_3(%arg0: i32) -> (i32, i32) {
    %c0_i32 = arith.constant 0 : i32
    %c0_i32_0 = arith.constant 0 : i32
    %c0_i32_1 = arith.constant 0 : i32
    return %c0_i32, %c0_i32_0 : i32, i32
  }
  func.func @transform_4(%arg0: i32) -> (i32, i32) {
    %c0_i32 = arith.constant 0 : i32
    %c0_i32_0 = arith.constant 0 : i32
    %c0_i32_1 = arith.constant 0 : i32
    return %c0_i32, %c0_i32_0 : i32, i32
  }
  func.func @transform_5(%arg0: i32) -> (i32, i32) {
    %c0_i32 = arith.constant 0 : i32
    %c0_i32_0 = arith.constant 0 : i32
    %c0_i32_1 = arith.constant 0 : i32
    return %c0_i32, %c0_i32_0 : i32, i32
  }
  func.func @transform_6(%arg0: i32) -> (i32, i32) {
    %c0_i32 = arith.constant 0 : i32
    %c0_i32_0 = arith.constant 0 : i32
    %c0_i32_1 = arith.constant 0 : i32
    return %c0_i32, %c0_i32_0 : i32, i32
  }
  func.func @transform_7(%arg0: i32) -> (i32, i32) {
    %c0_i32 = arith.constant 0 : i32
    %c0_i32_0 = arith.constant 0 : i32
    return %arg0, %c0_i32 : i32, i32
  }
  func.func @transform_8(%arg0: i32) -> (i32, i32) {
    %c0_i32 = arith.constant 0 : i32
    %c0_i32_0 = arith.constant 0 : i32
    return %arg0, %c0_i32 : i32, i32
  }
}

</mosaic_0001>

<llo_original>
// kernel: tpu_custom_call.1
$region0: #{tpu_custom_call.1}
  #allocation0 [shape = 'u32[]', space=smem, size = 0x4, offset = 0x4, fixed_abs, tag = 'smem constant byte address 0x4 - core index']
  #allocation1 [shape = 'u32[144,128]{1,0:T(1,128)}', space=vmem, size = 0x12000, scoped, tag = 'internal scratch']
  %s0 = inlined_call_operand.hbm [shape: f32[2,8], index: 0, kind: input, shape index: {}]
  %s1 = inlined_call_operand.hbm [shape: bf16[8,128], index: 1, kind: input, shape index: {}]
  %s2 = inlined_call_operand.vmem [shape: f32[1,128], index: 2, kind: input, shape index: {}]
  %s3 = inlined_call_operand.hbm [shape: bf16[128,128], index: 3, kind: input, shape index: {}]
  %s4 = inlined_call_operand.vmem [shape: f32[1,128], index: 4, kind: input, shape index: {}]
  %s5 = inlined_call_operand.hbm [shape: bf16[128,128], index: 5, kind: input, shape index: {}]
  %s6 = inlined_call_operand.vmem [shape: f32[1,128], index: 6, kind: input, shape index: {}]
  %s7 = inlined_call_operand.hbm [shape: f32[2,4], index: 7, kind: output, shape index: {0}]
  %s8 = inlined_call_operand.vmem [shape: f32[2,1], index: 8, kind: output, shape index: {1}]
  %9 = xla_tuple %s7, %s8
  %s10 = sld [smem:[#allocation0]]
  $region62: #{tpu_custom_call.1} parent=0
    _
  %s12 = ssub.s32 1, %s10
  %s13 = scalar_select 0, %s12, %s10
  $region1: #{tpu_custom_call.1} parent=0
    #allocation2 [shape = 'u8[1024]{0}', space=vmem, size = 0x400, scoped, tag = 'input window, operand 0, single buffered']
    #allocation3 [shape = 's32[1]{0}', space=sflag, size = 0x4, scoped, tag = 'scoped memory for tpu_custom_call.1']
    #allocation4 [shape = 's32[1]{0}', space=sflag, size = 0x4, scoped, tag = 'scoped memory for tpu_custom_call.1']
    #allocation5 [shape = 'u8[2048]{0}', space=vmem, size = 0x800, scoped, tag = 'input window, operand 1, single buffered']
    #allocation6 [shape = 's32[1]{0}', space=sflag, size = 0x4, scoped, tag = 'scoped memory for tpu_custom_call.1']
    #allocation7 [shape = 'u8[32768]{0}', space=vmem, size = 0x8000, scoped, tag = 'input window, operand 3, single buffered']
    #allocation8 [shape = 'u8[32768]{0}', space=vmem, size = 0x8000, scoped, tag = 'input window, operand 5, single buffered']
    #allocation9 [shape = 's32[1]{0}', space=sflag, size = 0x4, scoped, tag = 'scoped memory for tpu_custom_call.1']
    #allocation10 [shape = 'u8[1024]{0}', space=vmem, size = 0x400, scoped, tag = 'output window, operand 0, single buffered']
    %14 = vsyncpa [#allocation3], 0
    %15 = vsyncpa [#allocation6], 0
    %16 = vsyncpa [#allocation9], 0
    %17 = vsyncpa [#allocation4], 0
    // Predicated region
    $region2: #{tpu_custom_call.1} parent=1 // pred_check
      _
    $region3: #{tpu_custom_call.1} parent=1 // pred_check_branch
      %19 = sbr.rel (0) target = $region5
    $region4: #{tpu_custom_call.1} parent=1 // pred_region
      %s21 = ssub.s32 32, 32
      %22 = vsyncadd [#allocation3], %s21
      %s24 = sshll.u32 [#allocation2], 4
      %s25 = int_to_ptr.vmem [resolvable:$true] %s24
      %27 = dma.hbm_to_vmem [thread:$0]  %s0, 32, %s25, [#allocation3]
    $region5: #{tpu_custom_call.1} parent=1 // pred_fallthru
      _
    // Predicated region
    $region6: #{tpu_custom_call.1} parent=1 // pred_check
      _
    $region7: #{tpu_custom_call.1} parent=1 // pred_check_branch
      %29 = sbr.rel (0) target = $region9
    $region8: #{tpu_custom_call.1} parent=1 // pred_region
      %s31 = ssub.s32 64, 64
      %32 = vsyncadd [#allocation6], %s31
      %s34 = sshll.u32 [#allocation5], 4
      %s35 = int_to_ptr.vmem [resolvable:$true] %s34
      %37 = dma.hbm_to_vmem [thread:$0]  %s1, 64, %s35, [#allocation6]
    $region9: #{tpu_custom_call.1} parent=1 // pred_fallthru
      _
    // Predicated region
    $region10: #{tpu_custom_call.1} parent=1 // pred_check
      _
    $region11: #{tpu_custom_call.1} parent=1 // pred_check_branch
      %39 = sbr.rel (0) target = $region13
    $region12: #{tpu_custom_call.1} parent=1 // pred_region
      _
    $region13: #{tpu_custom_call.1} parent=1 // pred_fallthru
      _
    // Predicated region
    $region14: #{tpu_custom_call.1} parent=1 // pred_check
      _
    $region15: #{tpu_custom_call.1} parent=1 // pred_check_branch
      %41 = sbr.rel (0) target = $region17
    $region16: #{tpu_custom_call.1} parent=1 // pred_region
      %s43 = ssub.s32 1024, 1024
      %44 = vsyncadd [#allocation6], %s43
      %s45 = sshll.u32 [#allocation7], 4
      %s46 = int_to_ptr.vmem [resolvable:$true] %s45
      %51 = dma.hbm_to_vmem [thread:$0]  %s3, 1024, %s46, [#allocation6], 64, 64, 4
    $region17: #{tpu_custom_call.1} parent=1 // pred_fallthru
      _
    // Predicated region
    $region18: #{tpu_custom_call.1} parent=1 // pred_check
      _
    $region19: #{tpu_custom_call.1} parent=1 // pred_check_branch
      %53 = sbr.rel (0) target = $region21
    $region20: #{tpu_custom_call.1} parent=1 // pred_region
      _
    $region21: #{tpu_custom_call.1} parent=1 // pred_fallthru
      _
    // Predicated region
    $region22: #{tpu_custom_call.1} parent=1 // pred_check
      _
    $region23: #{tpu_custom_call.1} parent=1 // pred_check_branch
      %55 = sbr.rel (0) target = $region25
    $region24: #{tpu_custom_call.1} parent=1 // pred_region
      %s57 = ssub.s32 1024, 1024
      %58 = vsyncadd [#allocation9], %s57
      %s59 = sshll.u32 [#allocation8], 4
      %s60 = int_to_ptr.vmem [resolvable:$true] %s59
      %65 = dma.hbm_to_vmem [thread:$0]  %s5, 1024, %s60, [#allocation9], 64, 64, 4
    $region25: #{tpu_custom_call.1} parent=1 // pred_fallthru
      _
    // Predicated region
    $region26: #{tpu_custom_call.1} parent=1 // pred_check
      _
    $region27: #{tpu_custom_call.1} parent=1 // pred_check_branch
      %67 = sbr.rel (0) target = $region29
    $region28: #{tpu_custom_call.1} parent=1 // pred_region
      _
    $region29: #{tpu_custom_call.1} parent=1 // pred_fallthru
      _
    // Predicated region
    $region30: #{tpu_custom_call.1} parent=1 // pred_check
      _
    $region31: #{tpu_custom_call.1} parent=1 // pred_check_branch
      %69 = sbr.rel (0) target = $region33
    $region32: #{tpu_custom_call.1} parent=1 // pred_region
      %70 = dma.done [#allocation3], 32
    $region33: #{tpu_custom_call.1} parent=1 // pred_fallthru
      _
    // Predicated region
    $region34: #{tpu_custom_call.1} parent=1 // pred_check
      _
    $region35: #{tpu_custom_call.1} parent=1 // pred_check_branch
      %72 = sbr.rel (0) target = $region37
    $region36: #{tpu_custom_call.1} parent=1 // pred_region
      %73 = dma.done [#allocation6], 64
    $region37: #{tpu_custom_call.1} parent=1 // pred_fallthru
      _
    // Predicated region
    $region38: #{tpu_custom_call.1} parent=1 // pred_check
      _
    $region39: #{tpu_custom_call.1} parent=1 // pred_check_branch
      %75 = sbr.rel (0) target = $region41
    $region40: #{tpu_custom_call.1} parent=1 // pred_region
      %76 = dma.done [#allocation6], 1024
    $region41: #{tpu_custom_call.1} parent=1 // pred_fallthru
      _
    // Predicated region
    $region42: #{tpu_custom_call.1} parent=1 // pred_check
      _
    $region43: #{tpu_custom_call.1} parent=1 // pred_check_branch
      %78 = sbr.rel (0) target = $region45
    $region44: #{tpu_custom_call.1} parent=1 // pred_region
      %79 = dma.done [#allocation9], 1024
    $region45: #{tpu_custom_call.1} parent=1 // pred_fallthru
      _
    %v81 = vld [vmem:[#allocation2] sm:$0x3]
    %v82 = vpack.c.bf16 %v81, %v81
    %v83 = vld [vmem:[#allocation5] sm:$0xf]
    %v84 = vld [vmem:[%s2] sm:$0x1]
    %v86 = vlaneseq
    %v87 = vshrl.u32 %v86, 7
    %v88 = vsub.s32 0, %v87
    %v89 = vrot.slane %v84, %v88
    %vm91 = vcmask 64512
    %v93 = vsel %vm91, %v82, 0
    %vm95 = vcmask 1043456
    %v97 = vsel %vm95, %v83, 0
    %99 = vmatprep.subr.bf16.mxu0 0
    %100 = vmatpush1.bf16.msra.mxu0 %v97
    %101 = vmatprep.subr.bf16.mxu0 0
    %102 = vmatpush1.bf16.msra.mxu0 0
    %103 = vmatprep.subr.bf16.mxu0 0
    %104 = vmatpush1.bf16.msra.mxu0 0
    %105 = vmatprep.subr.bf16.mxu0 0
    %106 = vmatpush1.bf16.msra.mxu0 0
    %107 = vmatprep.subr.bf16.mxu0 0
    %108 = vmatpush1.bf16.msra.mxu0 0
    %109 = vmatprep.subr.bf16.mxu0 0
    %110 = vmatpush1.bf16.msra.mxu0 0
    %111 = vmatprep.subr.bf16.mxu0 0
    %112 = vmatpush1.bf16.msra.mxu0 0
    %113 = vmatprep.subr.bf16.mxu0 0
    %114 = vmatpush1.bf16.msra.mxu0 0
    %115 = vmatprep.subr.bf16.mxu0 0
    %116 = vmatpush1.bf16.msra.mxu0 0
    %117 = vmatprep.subr.bf16.mxu0 0
    %118 = vmatpush1.bf16.msra.mxu0 0
    %119 = vmatprep.subr.bf16.mxu0 0
    %120 = vmatpush1.bf16.msra.mxu0 0
    %121 = vmatprep.subr.bf16.mxu0 0
    %122 = vmatpush1.bf16.msra.mxu0 0
    %123 = vmatprep.subr.bf16.mxu0 0
    %124 = vmatpush1.bf16.msra.mxu0 0
    %125 = vmatprep.subr.bf16.mxu0 0
    %126 = vmatpush1.bf16.msra.mxu0 0
    %127 = vmatprep.subr.bf16.mxu0 0
    %128 = vmatpush1.bf16.msra.mxu0 0
    %129 = vmatprep.subr.bf16.mxu0 0
    %130 = vmatpush1.bf16.msra.mxu0 0
    %131 = vmatprep.mubr.bf16.mxu0 0
    %132 = vmatmul.mubr.bf16.gmra.mrb[0].mxu0 %v93
    %v133 = vpop.f32.mrb[0].mxu0
    %v134 = vadd.f32 %v89, %v133
    %v135 = vpop.f32.mrb[0].mxu0
    %v136 = vpop.f32.mrb[0].mxu0
    %v137 = vpop.f32.mrb[0].mxu0
    %138 = vdwg.mxu0
    %v139 = vmax.f32 %v134, 0.0
    %v140 = vpack.c.bf16 %v139, %v139
    %v141 = vld [vmem:[#allocation7] sm:$0xf]
    %v142 = vld [vmem:[#allocation7 + $0x4] sm:$0xf]
    %v143 = vld [vmem:[#allocation7 + $0x8] sm:$0xf]
    %v144 = vld [vmem:[#allocation7 + $0xc] sm:$0xf]
    %v145 = vld [vmem:[#allocation7 + $0x10] sm:$0xf]
    %v146 = vld [vmem:[#allocation7 + $0x14] sm:$0xf]
    %v147 = vld [vmem:[#allocation7 + $0x18] sm:$0xf]
    %v148 = vld [vmem:[#allocation7 + $0x1c] sm:$0xf]
    %v149 = vld [vmem:[#allocation7 + $0x20] sm:$0xf]
    %v150 = vld [vmem:[#allocation7 + $0x24] sm:$0xf]
    %v151 = vld [vmem:[#allocation7 + $0x28] sm:$0xf]
    %v152 = vld [vmem:[#allocation7 + $0x2c] sm:$0xf]
    %v153 = vld [vmem:[#allocation7 + $0x30] sm:$0xf]
    %v154 = vld [vmem:[#allocation7 + $0x34] sm:$0xf]
    %v155 = vld [vmem:[#allocation7 + $0x38] sm:$0xf]
    %v156 = vld [vmem:[#allocation7 + $0x3c] sm:$0xf]
    %v157 = vld [vmem:[%s4] sm:$0x1]
    %v159 = vlaneseq
    %v160 = vshrl.u32 %v159, 7
    %v161 = vsub.s32 0, %v160
    %v162 = vrot.slane %v157, %v161
    %v180 = vunpack.c.l.b16 %v141
    %v181 = vunpack.c.l.b16 %v142
    %v182 = vunpack.c.l.b16 %v143
    %v183 = vunpack.c.l.b16 %v144
    %v184 = vunpack.c.l.b16 %v145
    %v185 = vunpack.c.l.b16 %v146
    %v186 = vunpack.c.l.b16 %v147
    %v187 = vunpack.c.l.b16 %v148
    %v188 = vunpack.c.l.b16 %v149
    %v189 = vunpack.c.l.b16 %v150
    %v190 = vunpack.c.l.b16 %v151
    %v191 = vunpack.c.l.b16 %v152
    %v192 = vunpack.c.l.b16 %v153
    %v193 = vunpack.c.l.b16 %v154
    %v194 = vunpack.c.l.b16 %v155
    %v195 = vunpack.c.l.b16 %v156
    %v196 = vpack.c.b16 %v181, %v180
    %v197 = vpack.c.b16 %v183, %v182
    %v198 = vpack.c.b16 %v185, %v184
    %v199 = vpack.c.b16 %v187, %v186
    %v200 = vpack.c.b16 %v189, %v188
    %v201 = vpack.c.b16 %v191, %v190
    %v202 = vpack.c.b16 %v193, %v192
    %v203 = vpack.c.b16 %v195, %v194
    %212 = vmatprep.subr.bf16.mxu0 0
    %213 = vmatpush1.bf16.msra.mxu0 %v196
    %214 = vmatprep.subr.bf16.mxu0 0
    %215 = vmatpush1.bf16.msra.mxu0 %v197
    %216 = vmatprep.subr.bf16.mxu0 0
    %217 = vmatpush1.bf16.msra.mxu0 %v198
    %218 = vmatprep.subr.bf16.mxu0 0
    %219 = vmatpush1.bf16.msra.mxu0 %v199
    %220 = vmatprep.subr.bf16.mxu0 0
    %221 = vmatpush1.bf16.msra.mxu0 %v200
    %222 = vmatprep.subr.bf16.mxu0 0
    %223 = vmatpush1.bf16.msra.mxu0 %v201
    %224 = vmatprep.subr.bf16.mxu0 0
    %225 = vmatpush1.bf16.msra.mxu0 %v202
    %226 = vmatprep.subr.bf16.mxu0 0
    %227 = vmatpush1.bf16.msra.mxu0 %v203
    %228 = vmatprep.subr.bf16.mxu0 0
    %229 = vmatpush1.bf16.msra.mxu0 0
    %230 = vmatprep.subr.bf16.mxu0 0
    %231 = vmatpush1.bf16.msra.mxu0 0
    %232 = vmatprep.subr.bf16.mxu0 0
    %233 = vmatpush1.bf16.msra.mxu0 0
    %234 = vmatprep.subr.bf16.mxu0 0
    %235 = vmatpush1.bf16.msra.mxu0 0
    %236 = vmatprep.subr.bf16.mxu0 0
    %237 = vmatpush1.bf16.msra.mxu0 0
    %238 = vmatprep.subr.bf16.mxu0 0
    %239 = vmatpush1.bf16.msra.mxu0 0
    %240 = vmatprep.subr.bf16.mxu0 0
    %241 = vmatpush1.bf16.msra.mxu0 0
    %242 = vmatprep.subr.bf16.mxu0 0
    %243 = vmatpush1.bf16.msra.mxu0 0
    %244 = vmatprep.mubr.bf16.mxu0 0
    %245 = vmatmul.mubr.bf16.gmra.mrb[0].mxu0 %v140
    %v246 = vpop.f32.mrb[0].mxu0
    %v247 = vadd.f32 %v162, %v246
    %v248 = vpop.f32.mrb[0].mxu0
    %v249 = vpop.f32.mrb[0].mxu0
    %v250 = vpop.f32.mrb[0].mxu0
    %251 = vdwg.mxu0
    %v252 = vmax.f32 %v247, 0.0
    %v253 = vpack.c.bf16 %v252, %v252
    %v254 = vld [vmem:[#allocation8] sm:$0xf]
    %v255 = vld [vmem:[#allocation8 + $0x4] sm:$0xf]
    %v256 = vld [vmem:[#allocation8 + $0x8] sm:$0xf]
    %v257 = vld [vmem:[#allocation8 + $0xc] sm:$0xf]
    %v258 = vld [vmem:[#allocation8 + $0x10] sm:$0xf]
    %v259 = vld [vmem:[#allocation8 + $0x14] sm:$0xf]
    %v260 = vld [vmem:[#allocation8 + $0x18] sm:$0xf]
    %v261 = vld [vmem:[#allocation8 + $0x1c] sm:$0xf]
    %v262 = vld [vmem:[#allocation8 + $0x20] sm:$0xf]
    %v263 = vld [vmem:[#allocation8 + $0x24] sm:$0xf]
    %v264 = vld [vmem:[#allocation8 + $0x28] sm:$0xf]
    %v265 = vld [vmem:[#allocation8 + $0x2c] sm:$0xf]
    %v266 = vld [vmem:[#allocation8 + $0x30] sm:$0xf]
    %v267 = vld [vmem:[#allocation8 + $0x34] sm:$0xf]
    %v268 = vld [vmem:[#allocation8 + $0x38] sm:$0xf]
    %v269 = vld [vmem:[#allocation8 + $0x3c] sm:$0xf]
    %v270 = vld [vmem:[%s6] sm:$0x1]
    %v272 = vlaneseq
    %v273 = vshrl.u32 %v272, 7
    %v274 = vsub.s32 0, %v273
    %v275 = vrot.slane %v270, %v274
    %v293 = vunpack.c.l.b16 %v254
    %v294 = vunpack.c.l.b16 %v255
    %v295 = vunpack.c.l.b16 %v256
    %v296 = vunpack.c.l.b16 %v257
    %v297 = vunpack.c.l.b16 %v258
    %v298 = vunpack.c.l.b16 %v259
    %v299 = vunpack.c.l.b16 %v260
    %v300 = vunpack.c.l.b16 %v261
    %v301 = vunpack.c.l.b16 %v262
    %v302 = vunpack.c.l.b16 %v263
    %v303 = vunpack.c.l.b16 %v264
    %v304 = vunpack.c.l.b16 %v265
    %v305 = vunpack.c.l.b16 %v266
    %v306 = vunpack.c.l.b16 %v267
    %v307 = vunpack.c.l.b16 %v268
    %v308 = vunpack.c.l.b16 %v269
    %v309 = vpack.c.b16 %v294, %v293
    %v310 = vpack.c.b16 %v296, %v295
    %v311 = vpack.c.b16 %v298, %v297
    %v312 = vpack.c.b16 %v300, %v299
    %v313 = vpack.c.b16 %v302, %v301
    %v314 = vpack.c.b16 %v304, %v303
    %v315 = vpack.c.b16 %v306, %v305
    %v316 = vpack.c.b16 %v308, %v307
    %325 = vmatprep.subr.bf16.mxu0 0
    %326 = vmatpush1.bf16.msra.mxu0 %v309
    %327 = vmatprep.subr.bf16.mxu0 0
    %328 = vmatpush1.bf16.msra.mxu0 %v310
    %329 = vmatprep.subr.bf16.mxu0 0
    %330 = vmatpush1.bf16.msra.mxu0 %v311
    %331 = vmatprep.subr.bf16.mxu0 0
    %332 = vmatpush1.bf16.msra.mxu0 %v312
    %333 = vmatprep.subr.bf16.mxu0 0
    %334 = vmatpush1.bf16.msra.mxu0 %v313
    %335 = vmatprep.subr.bf16.mxu0 0
    %336 = vmatpush1.bf16.msra.mxu0 %v314
    %337 = vmatprep.subr.bf16.mxu0 0
    %338 = vmatpush1.bf16.msra.mxu0 %v315
    %339 = vmatprep.subr.bf16.mxu0 0
    %340 = vmatpush1.bf16.msra.mxu0 %v316
    %341 = vmatprep.subr.bf16.mxu0 0
    %342 = vmatpush1.bf16.msra.mxu0 0
    %343 = vmatprep.subr.bf16.mxu0 0
    %344 = vmatpush1.bf16.msra.mxu0 0
    %345 = vmatprep.subr.bf16.mxu0 0
    %346 = vmatpush1.bf16.msra.mxu0 0
    %347 = vmatprep.subr.bf16.mxu0 0
    %348 = vmatpush1.bf16.msra.mxu0 0
    %349 = vmatprep.subr.bf16.mxu0 0
    %350 = vmatpush1.bf16.msra.mxu0 0
    %351 = vmatprep.subr.bf16.mxu0 0
    %352 = vmatpush1.bf16.msra.mxu0 0
    %353 = vmatprep.subr.bf16.mxu0 0
    %354 = vmatpush1.bf16.msra.mxu0 0
    %355 = vmatprep.subr.bf16.mxu0 0
    %356 = vmatpush1.bf16.msra.mxu0 0
    %357 = vmatprep.mubr.bf16.mxu0 0
    %358 = vmatmul.mubr.bf16.gmra.mrb[0].mxu0 %v253
    %v359 = vpop.f32.mrb[0].mxu0
    %v360 = vadd.f32 %v275, %v359
    %v361 = vpop.f32.mrb[0].mxu0
    %v362 = vpop.f32.mrb[0].mxu0
    %v363 = vpop.f32.mrb[0].mxu0
    %364 = vdwg.mxu0
    %vm365 = vcmask 25600
    %366 = vst.msk [vmem:[#allocation10] sm:$0x3] %vm365, %v360
    %368 = vrot.lane.b32.xlu0 %v360, 124
    %v369 = vpop.permute.xlu0 %368
    %vm371 = vcmask 1024
    %372 = vst.msk [vmem:[%s8] sm:$0x3] %vm371, %v369
    // Predicated region
    $region46: #{tpu_custom_call.1} parent=1 // pred_check
      _
    $region47: #{tpu_custom_call.1} parent=1 // pred_check_branch
      %374 = sbr.rel (0) target = $region49
    $region48: #{tpu_custom_call.1} parent=1 // pred_region
      %s376 = ssub.s32 32, 32
      %377 = vsyncadd [#allocation4], %s376
      %s379 = sshll.u32 [#allocation10], 4
      %s380 = int_to_ptr.vmem [resolvable:$true] %s379
      %382 = dma.vmem_to_hbm [thread:$0]  %s380, 32, %s7, [#allocation4]
    $region49: #{tpu_custom_call.1} parent=1 // pred_fallthru
      _
    // Predicated region
    $region50: #{tpu_custom_call.1} parent=1 // pred_check
      _
    $region51: #{tpu_custom_call.1} parent=1 // pred_check_branch
      %384 = sbr.rel (0) target = $region53
    $region52: #{tpu_custom_call.1} parent=1 // pred_region
      _
    $region53: #{tpu_custom_call.1} parent=1 // pred_fallthru
      _
    // Predicated region
    $region54: #{tpu_custom_call.1} parent=1 // pred_check
      _
    $region55: #{tpu_custom_call.1} parent=1 // pred_check_branch
      %386 = sbr.rel (0) target = $region57
    $region56: #{tpu_custom_call.1} parent=1 // pred_region
      %387 = dma.done [#allocation4], 32
    $region57: #{tpu_custom_call.1} parent=1 // pred_fallthru
      _
    // Predicated region
    $region58: #{tpu_custom_call.1} parent=1 // pred_check
      _
    $region59: #{tpu_custom_call.1} parent=1 // pred_check_branch
      %389 = sbr.rel (0) target = $region61
    $region60: #{tpu_custom_call.1} parent=1 // pred_region
      _
    $region61: #{tpu_custom_call.1} parent=1 // pred_fallthru
      _
    %390 = vsyncpa [#allocation3], 1
    %391 = vsyncpa [#allocation6], 1
    %392 = vsyncpa [#allocation9], 1
    %393 = vsyncpa [#allocation4], 1

</llo_original>
